<compile_context>
chip_gen: v7x
topology: tpu7x:2x2x1
jax: 0.10.0
libtpu: 0.0.40
codegen_flags: <defaults>
</compile_context>

<pallas_src>
import functools

import jax
import jax.numpy as jnp
from jax.experimental import pallas as pl
from jax.experimental.pallas import tpu as pltpu

FEATURE_DIM = 512   # res18 backbone
HIDDEN_DIM = 128
NUM_DOMAIN = 3
MAX_TILE_B = 1024   # safe for v7x (64 MiB VMEM) and plenty to amortize grid overhead


def _round_up(n, m):
    return ((n + m - 1) // m) * m


def _ebm_kernel(dom_ref, x_ref, w0_ref, b0_ref, w1_ref, b1_ref, w2_ref, b2_ref,
                o_ref):
    """One batch tile through one ebm head.

    tanh -> fc0(bf16 MXU, f32 acc) -> swish -> fc1 -> swish -> VPU dot -> sigmoid
    """
    del dom_ref  # head selection happens in the weight index_maps

    # prenorm='tanh' (f32 on the EUP)
    x = jnp.tanh(x_ref[...].astype(jnp.float32))

    # layer0: (TILE_B, F) @ (F, F); bf16 operands, f32 accumulation
    h0 = jnp.dot(x.astype(jnp.bfloat16), w0_ref[...],
                 preferred_element_type=jnp.float32) + b0_ref[...]
    h0 = h0 * jax.nn.sigmoid(h0)          # swish; drop0 is identity in eval mode

    # layer1: (TILE_B, F) @ (F, 128)
    h1 = jnp.dot(h0.astype(jnp.bfloat16), w1_ref[...],
                 preferred_element_type=jnp.float32) + b1_ref[...]
    h1 = h1 * jax.nn.sigmoid(h1)          # swish; drop1 is identity in eval mode

    # layer2: (TILE_B,128)@(128,1) as VPU multiply + lane reduction (skip MXU)
    energy = jnp.sum(h1 * w2_ref[...], axis=-1, keepdims=True) + b2_ref[...]

    # energy_type='sigmoid'
    o_ref[...] = jax.nn.sigmoid(energy).astype(o_ref.dtype)


@functools.partial(jax.jit, static_argnames=("tile_b",))
def _ebm_forward(domain, x, w0, b0, w1, b1, w2, b2, *, tile_b):
    batch, feat = x.shape
    hidden = w1.shape[-1]
    num_tiles = batch // tile_b

    grid_spec = pltpu.PrefetchScalarGridSpec(
        num_scalar_prefetch=1,          # domainid lands in SMEM
        grid=(num_tiles,),
        in_specs=[
            # x streams through the grid
            pl.BlockSpec((tile_b, feat), lambda i, dom: (i, 0)),
            # stacked weights/biases: head picked by domainid; block index is
            # constant across the batch grid so they stay resident in VMEM.
            pl.BlockSpec((None, feat, feat), lambda i, dom: (dom[0], 0, 0)),
            pl.BlockSpec((None, 1, feat), lambda i, dom: (dom[0], 0, 0)),
            pl.BlockSpec((None, feat, hidden), lambda i, dom: (dom[0], 0, 0)),
            pl.BlockSpec((None, 1, hidden), lambda i, dom: (dom[0], 0, 0)),
            pl.BlockSpec((None, 1, hidden), lambda i, dom: (dom[0], 0, 0)),
            pl.BlockSpec((None, 1, 1), lambda i, dom: (dom[0], 0, 0)),
        ],
        out_specs=pl.BlockSpec((tile_b, 1), lambda i, dom: (i, 0)),
    )

    return pl.pallas_call(
        _ebm_kernel,
        out_shape=jax.ShapeDtypeStruct((batch, 1), jnp.float32),
        grid_spec=grid_spec,
        compiler_params=pltpu.CompilerParams(
            dimension_semantics=("parallel",),     # shard batch over v7x's 2 TCs
            vmem_limit_bytes=48 * 1024 * 1024,
        ),
    )(domain, x, w0, b0, w1, b1, w2, b2)


def make_ebm_params(key, feature_dim=FEATURE_DIM, hidden_dim=HIDDEN_DIM):
    """Deterministic init of one ebm head (PyTorch-Linear-like uniform init).

    Weights stored as (in_features, out_features); layer2 stored as a
    (1, hidden) row vector (used on the VPU inside the kernel)."""
    ks = jax.random.split(key, 6)

    def linear(kw, kb, fan_in, fan_out):
        bound = 1.0 / jnp.sqrt(fan_in)
        w = jax.random.uniform(kw, (fan_in, fan_out), jnp.float32, -bound, bound)
        b = jax.random.uniform(kb, (1, fan_out), jnp.float32, -bound, bound)
        return w, b

    w0, b0 = linear(ks[0], ks[1], feature_dim, feature_dim)
    w1, b1 = linear(ks[2], ks[3], feature_dim, hidden_dim)
    w2, b2 = linear(ks[4], ks[5], hidden_dim, 1)
    w2_row = w2.T                         # (1, hidden)
    return (w0, b0, w1, b1, w2_row, b2)   # b2: (1, 1)


class EbmsPallas:
    """JAX/Pallas equivalent of the PyTorch `ebms` module (eval mode)."""

    def __init__(self, key, num_domain=NUM_DOMAIN, feature_dim=FEATURE_DIM,
                 hidden_dim=HIDDEN_DIM):
        self.feature_dim = feature_dim
        keys = jax.random.split(key, num_domain)
        heads = [make_ebm_params(k, feature_dim, hidden_dim) for k in keys]
        self.heads_f32 = heads            # kept for reference checking

        stack = lambda idx: jnp.stack([h[idx] for h in heads])
        # MXU operands in bf16 (halves weight DMA, native MXU dtype); biases
        # and the layer2 row vector stay f32 (VPU path).
        self.w0 = stack(0).astype(jnp.bfloat16)   # (D, F, F)
        self.b0 = stack(1)                        # (D, 1, F)
        self.w1 = stack(2).astype(jnp.bfloat16)   # (D, F, H)
        self.b1 = stack(3)                        # (D, 1, H)
        self.w2 = stack(4)                        # (D, 1, H) f32
        self.b2 = stack(5)                        # (D, 1, 1) f32

    def __call__(self, x, domainid):
        batch = x.shape[0]
        tile_b = min(MAX_TILE_B, _round_up(batch, 8))
        padded = _round_up(batch, tile_b)
        if padded != batch:
            x = jnp.pad(x, ((0, padded - batch), (0, 0)))
        dom = jnp.asarray([domainid], dtype=jnp.int32)
        out = _ebm_forward(dom, x, self.w0, self.b0, self.w1, self.b1,
                           self.w2, self.b2, tile_b=tile_b)
        return out[:batch]


def _reference_forward(x, params):
    """Pure-JAX f32 reference for correctness checking."""
    w0, b0, w1, b1, w2_row, b2 = params
    swish = lambda v: v * jax.nn.sigmoid(v)
    h = jnp.tanh(x)
    h = swish(h @ w0 + b0)
    h = swish(h @ w1 + b1)
    return jax.nn.sigmoid(h @ w2_row.T + b2)


if __name__ == "__main__":
    key = jax.random.PRNGKey(0)
    k_model, k_x = jax.random.split(key)

    B = 8  # small batch
    model = EbmsPallas(k_model)
    x = jax.random.normal(k_x, (B, FEATURE_DIM), jnp.float32)

    domainid = 1
    energy = jax.block_until_ready(model(x, domainid))
    assert energy.shape == (B, 1), energy.shape

    # sanity check against a pure-JAX f32 reference (bf16 MXU operands ->
    # loosened tolerance on the post-sigmoid output)
    ref = _reference_forward(x, model.heads_f32[domainid])
    assert jnp.allclose(energy, ref, atol=2e-2, rtol=2e-2), (energy, ref)

    print("KERNEL_OK")
</pallas_src>

<mosaic_0001>
module attributes {stable_mosaic.version = 11 : i64} {
  func.func @_ebm_kernel(%arg0: i32, %arg1: memref<1xi32, #tpu.memory_space<smem>>, %arg2: memref<8x512xf32, #tpu.memory_space<vmem>>, %arg3: memref<1x512x512xbf16, #tpu.memory_space<vmem>>, %arg4: memref<1x1x512xf32, #tpu.memory_space<vmem>>, %arg5: memref<1x512x128xbf16, #tpu.memory_space<vmem>>, %arg6: memref<1x1x128xf32, #tpu.memory_space<vmem>>, %arg7: memref<1x1x128xf32, #tpu.memory_space<vmem>>, %arg8: memref<1x1x1xf32, #tpu.memory_space<vmem>>, %arg9: memref<8x1xf32, #tpu.memory_space<vmem>>) attributes {dimension_semantics = [#tpu.dimension_semantics<parallel>], iteration_bounds = array<i64: 1>, scalar_prefetch = 1 : i64, scratch_operands = 0 : i64, tpu.core_type = #tpu.core_type<tc>, window_params = [{transform_indices = @transform_0, window_bounds = array<i64: 8, 512>}, {transform_indices = @transform_1, window_bounds = array<i64: 1, 512, 512>}, {transform_indices = @transform_2, window_bounds = array<i64: 1, 1, 512>}, {transform_indices = @transform_3, window_bounds = array<i64: 1, 512, 128>}, {transform_indices = @transform_4, window_bounds = array<i64: 1, 1, 128>}, {transform_indices = @transform_5, window_bounds = array<i64: 1, 1, 128>}, {transform_indices = @transform_6, window_bounds = array<i64: 1, 1, 1>}, {transform_indices = @transform_7, window_bounds = array<i64: 8, 1>}]} {
    %c0 = arith.constant 0 : index
    %c0_0 = arith.constant 0 : index
    %0 = vector.load %arg2[%c0, %c0_0] : memref<8x512xf32, #tpu.memory_space<vmem>>, vector<8x512xf32>
    %1 = math.tanh %0 : vector<8x512xf32>
    %2 = arith.truncf %1 : vector<8x512xf32> to vector<8x512xbf16>
    %c0_1 = arith.constant 0 : index
    %c0_2 = arith.constant 0 : index
    %c0_3 = arith.constant 0 : index
    %3 = vector.load %arg3[%c0_1, %c0_2, %c0_3] : memref<1x512x512xbf16, #tpu.memory_space<vmem>>, vector<1x512x512xbf16>
    %4 = vector.shape_cast %3 : vector<1x512x512xbf16> to vector<512x512xbf16>
    %cst = arith.constant dense<0.000000e+00> : vector<8x512xf32>
    %5 = tpu.matmul %2, %4, %cst {dimension_numbers = #tpu.dot_dimension_numbers<[1], [0], [0], [1], [0, 0, 1, 1], [], []>} : vector<8x512xbf16>, vector<512x512xbf16>, vector<8x512xf32> -> vector<8x512xf32>
    %c0_4 = arith.constant 0 : index
    %c0_5 = arith.constant 0 : index
    %c0_6 = arith.constant 0 : index
    %6 = vector.load %arg4[%c0_4, %c0_5, %c0_6] : memref<1x1x512xf32, #tpu.memory_space<vmem>>, vector<1x1x512xf32>
    %7 = vector.shape_cast %6 : vector<1x1x512xf32> to vector<1x512xf32>
    %8 = vector.broadcast %7 : vector<1x512xf32> to vector<8x512xf32>
    %9 = arith.addf %5, %8 : vector<8x512xf32>
    %10 = arith.negf %9 : vector<8x512xf32>
    %11 = math.exp %10 : vector<8x512xf32>
    %cst_7 = arith.constant 1.000000e+00 : f32
    %12 = vector.broadcast %cst_7 : f32 to vector<8x512xf32>
    %13 = arith.addf %12, %11 : vector<8x512xf32>
    %14 = arith.divf %12, %13 : vector<8x512xf32>
    %15 = arith.mulf %9, %14 : vector<8x512xf32>
    %16 = arith.truncf %15 : vector<8x512xf32> to vector<8x512xbf16>
    %c0_8 = arith.constant 0 : index
    %c0_9 = arith.constant 0 : index
    %c0_10 = arith.constant 0 : index
    %17 = vector.load %arg5[%c0_8, %c0_9, %c0_10] : memref<1x512x128xbf16, #tpu.memory_space<vmem>>, vector<1x512x128xbf16>
    %18 = vector.shape_cast %17 : vector<1x512x128xbf16> to vector<512x128xbf16>
    %cst_11 = arith.constant dense<0.000000e+00> : vector<8x128xf32>
    %19 = tpu.matmul %16, %18, %cst_11 {dimension_numbers = #tpu.dot_dimension_numbers<[1], [0], [0], [1], [0, 0, 1, 1], [], []>} : vector<8x512xbf16>, vector<512x128xbf16>, vector<8x128xf32> -> vector<8x128xf32>
    %c0_12 = arith.constant 0 : index
    %c0_13 = arith.constant 0 : index
    %c0_14 = arith.constant 0 : index
    %20 = vector.load %arg6[%c0_12, %c0_13, %c0_14] : memref<1x1x128xf32, #tpu.memory_space<vmem>>, vector<1x1x128xf32>
    %21 = vector.shape_cast %20 : vector<1x1x128xf32> to vector<1x128xf32>
    %22 = vector.broadcast %21 : vector<1x128xf32> to vector<8x128xf32>
    %23 = arith.addf %19, %22 : vector<8x128xf32>
    %24 = arith.negf %23 : vector<8x128xf32>
    %25 = math.exp %24 : vector<8x128xf32>
    %cst_15 = arith.constant 1.000000e+00 : f32
    %26 = vector.broadcast %cst_15 : f32 to vector<8x128xf32>
    %27 = arith.addf %26, %25 : vector<8x128xf32>
    %28 = arith.divf %26, %27 : vector<8x128xf32>
    %29 = arith.mulf %23, %28 : vector<8x128xf32>
    %c0_16 = arith.constant 0 : index
    %c0_17 = arith.constant 0 : index
    %c0_18 = arith.constant 0 : index
    %30 = vector.load %arg7[%c0_16, %c0_17, %c0_18] : memref<1x1x128xf32, #tpu.memory_space<vmem>>, vector<1x1x128xf32>
    %31 = vector.shape_cast %30 : vector<1x1x128xf32> to vector<1x128xf32>
    %32 = vector.broadcast %31 : vector<1x128xf32> to vector<8x128xf32>
    %33 = arith.mulf %29, %32 : vector<8x128xf32>
    %cst_19 = arith.constant dense<0.000000e+00> : vector<8xf32>
    %34 = vector.multi_reduction <add>, %33, %cst_19 [1] : vector<8x128xf32> to vector<8xf32>
    %35 = vector.shape_cast %34 : vector<8xf32> to vector<8x1xf32>
    %c0_20 = arith.constant 0 : index
    %c0_21 = arith.constant 0 : index
    %c0_22 = arith.constant 0 : index
    %36 = vector.load %arg8[%c0_20, %c0_21, %c0_22] : memref<1x1x1xf32, #tpu.memory_space<vmem>>, vector<1x1x1xf32>
    %37 = vector.shape_cast %36 : vector<1x1x1xf32> to vector<1x1xf32>
    %38 = vector.broadcast %37 : vector<1x1xf32> to vector<8x1xf32>
    %39 = arith.addf %35, %38 : vector<8x1xf32>
    %40 = arith.negf %39 : vector<8x1xf32>
    %41 = math.exp %40 : vector<8x1xf32>
    %cst_23 = arith.constant 1.000000e+00 : f32
    %42 = vector.broadcast %cst_23 : f32 to vector<8x1xf32>
    %43 = arith.addf %42, %41 : vector<8x1xf32>
    %44 = arith.divf %42, %43 : vector<8x1xf32>
    %c0_24 = arith.constant 0 : index
    %c0_25 = arith.constant 0 : index
    %45 = vector.load %arg9[%c0_24, %c0_25] : memref<8x1xf32, #tpu.memory_space<vmem>>, vector<8x1xf32>
    tpu.vector_store %arg9[%c0_24, %c0_25], %44 {strides = array<i32>} : memref<8x1xf32, #tpu.memory_space<vmem>>, vector<8x1xf32>,
    return
  }
  func.func @transform_0(%arg0: i32, %arg1: memref<1xi32, #tpu.memory_space<smem>>) -> (i32, i32) {
    %c0_i32 = arith.constant 0 : i32
    %c0_i32_0 = arith.constant 0 : i32
    return %arg0, %c0_i32 : i32, i32
  }
  func.func @transform_1(%arg0: i32, %arg1: memref<1xi32, #tpu.memory_space<smem>>) -> (i32, i32, i32) {
    %c0 = arith.constant 0 : index
    %0 = memref.load %arg1[%c0] : memref<1xi32, #tpu.memory_space<smem>>
    %c0_i32 = arith.constant 0 : i32
    %c0_i32_0 = arith.constant 0 : i32
    %c0_i32_1 = arith.constant 0 : i32
    return %0, %c0_i32, %c0_i32_0 : i32, i32, i32
  }
  func.func @transform_2(%arg0: i32, %arg1: memref<1xi32, #tpu.memory_space<smem>>) -> (i32, i32, i32) {
    %c0 = arith.constant 0 : index
    %0 = memref.load %arg1[%c0] : memref<1xi32, #tpu.memory_space<smem>>
    %c0_i32 = arith.constant 0 : i32
    %c0_i32_0 = arith.constant 0 : i32
    %c0_i32_1 = arith.constant 0 : i32
    return %0, %c0_i32, %c0_i32_0 : i32, i32, i32
  }
  func.func @transform_3(%arg0: i32, %arg1: memref<1xi32, #tpu.memory_space<smem>>) -> (i32, i32, i32) {
    %c0 = arith.constant 0 : index
    %0 = memref.load %arg1[%c0] : memref<1xi32, #tpu.memory_space<smem>>
    %c0_i32 = arith.constant 0 : i32
    %c0_i32_0 = arith.constant 0 : i32
    %c0_i32_1 = arith.constant 0 : i32
    return %0, %c0_i32, %c0_i32_0 : i32, i32, i32
  }
  func.func @transform_4(%arg0: i32, %arg1: memref<1xi32, #tpu.memory_space<smem>>) -> (i32, i32, i32) {
    %c0 = arith.constant 0 : index
    %0 = memref.load %arg1[%c0] : memref<1xi32, #tpu.memory_space<smem>>
    %c0_i32 = arith.constant 0 : i32
    %c0_i32_0 = arith.constant 0 : i32
    %c0_i32_1 = arith.constant 0 : i32
    return %0, %c0_i32, %c0_i32_0 : i32, i32, i32
  }
  func.func @transform_5(%arg0: i32, %arg1: memref<1xi32, #tpu.memory_space<smem>>) -> (i32, i32, i32) {
    %c0 = arith.constant 0 : index
    %0 = memref.load %arg1[%c0] : memref<1xi32, #tpu.memory_space<smem>>
    %c0_i32 = arith.constant 0 : i32
    %c0_i32_0 = arith.constant 0 : i32
    %c0_i32_1 = arith.constant 0 : i32
    return %0, %c0_i32, %c0_i32_0 : i32, i32, i32
  }
  func.func @transform_6(%arg0: i32, %arg1: memref<1xi32, #tpu.memory_space<smem>>) -> (i32, i32, i32) {
    %c0 = arith.constant 0 : index
    %0 = memref.load %arg1[%c0] : memref<1xi32, #tpu.memory_space<smem>>
    %c0_i32 = arith.constant 0 : i32
    %c0_i32_0 = arith.constant 0 : i32
    %c0_i32_1 = arith.constant 0 : i32
    return %0, %c0_i32, %c0_i32_0 : i32, i32, i32
  }
  func.func @transform_7(%arg0: i32, %arg1: memref<1xi32, #tpu.memory_space<smem>>) -> (i32, i32) {
    %c0_i32 = arith.constant 0 : i32
    %c0_i32_0 = arith.constant 0 : i32
    return %arg0, %c0_i32 : i32, i32
  }
}

</mosaic_0001>

<llo_original>
// kernel: _ebm_forward.1
$region0: #{_ebm_forward.1}
  #allocation0 [shape = 'u32[]', space=smem, size = 0x4, offset = 0x4, fixed_abs, tag = 'smem constant byte address 0x4 - core index']
  #allocation1 [shape = 'u32[144,128]{1,0:T(1,128)}', space=vmem, size = 0x12000, scoped, tag = 'internal scratch']
  #allocation2 [shape = 's32[1]{0}', space=sflag, size = 0x4, scoped, tag = 'scoped memory for _ebm_forward.1']
  #allocation3 [shape = 's32[1]{0:T(128)S(6)}', space=smem, size = 0x200, scoped, tag = 'prefetched SMEM operand 0']
  %s0 = inlined_call_operand.<no memory space> [shape: s32[1], index: 0, kind: input, shape index: {}]
  %s1 = inlined_call_operand.hbm [shape: f32[8,512], index: 1, kind: input, shape index: {}]
  %s2 = inlined_call_operand.hbm [shape: bf16[3,512,512], index: 2, kind: input, shape index: {}]
  %s3 = inlined_call_operand.hbm [shape: f32[3,1,512], index: 3, kind: input, shape index: {}]
  %s4 = inlined_call_operand.hbm [shape: bf16[3,512,128], index: 4, kind: input, shape index: {}]
  %s5 = inlined_call_operand.hbm [shape: f32[3,1,128], index: 5, kind: input, shape index: {}]
  %s6 = inlined_call_operand.hbm [shape: f32[3,1,128], index: 6, kind: input, shape index: {}]
  %s7 = inlined_call_operand.vmem [shape: f32[3,1,1], index: 7, kind: input, shape index: {}]
  %s8 = inlined_call_operand.vmem [shape: f32[8,1], index: 8, kind: output, shape index: {}]
  %s9 = sld [smem:[#allocation0]]
  $region62: #{_ebm_forward.1} parent=0
    _
  %s11 = ssub.s32 1, %s9
  %s12 = scalar_select 0, %s11, %s9
  %13 = sst [smem:[#allocation3]] %s0
  $region1: #{_ebm_forward.1} parent=0
    #allocation4 [shape = 'u8[16384]{0}', space=vmem, size = 0x4000, scoped, tag = 'input window, operand 1, single buffered']
    #allocation5 [shape = 's32[1]{0}', space=sflag, size = 0x4, scoped, tag = 'scoped memory for _ebm_forward.1']
    #allocation6 [shape = 'u8[524288]{0}', space=vmem, size = 0x80000, scoped, tag = 'input window, operand 2, single buffered']
    #allocation7 [shape = 's32[1]{0}', space=sflag, size = 0x4, scoped, tag = 'scoped memory for _ebm_forward.1']
    #allocation8 [shape = 'u8[2048]{0}', space=vmem, size = 0x800, scoped, tag = 'input window, operand 3, single buffered']
    #allocation9 [shape = 'u8[131072]{0}', space=vmem, size = 0x20000, scoped, tag = 'input window, operand 4, single buffered']
    #allocation10 [shape = 's32[1]{0}', space=sflag, size = 0x4, scoped, tag = 'scoped memory for _ebm_forward.1']
    #allocation11 [shape = 'u8[512]{0}', space=vmem, size = 0x400, scoped, tag = 'input window, operand 5, single buffered']
    #allocation12 [shape = 'u8[512]{0}', space=vmem, size = 0x400, scoped, tag = 'input window, operand 6, single buffered']
    #allocation13 [shape = 's32[1]{0}', space=sflag, size = 0x4, scoped, tag = 'scoped memory for _ebm_forward.1']
    %14 = vsyncpa [#allocation5], 0
    %15 = vsyncpa [#allocation7], 0
    %16 = vsyncpa [#allocation10], 0
    %17 = vsyncpa [#allocation13], 0
    // Predicated region
    $region2: #{_ebm_forward.1} parent=1 // pred_check
      _
    $region3: #{_ebm_forward.1} parent=1 // pred_check_branch
      %19 = sbr.rel (0) target = $region5
    $region4: #{_ebm_forward.1} parent=1 // pred_region
      %s21 = ssub.s32 512, 512
      %22 = vsyncadd [#allocation5], %s21
      %s24 = sshll.u32 [#allocation4], 4
      %s25 = int_to_ptr.vmem [resolvable:$true] %s24
      %27 = dma.hbm_to_vmem [thread:$0]  %s1, 512, %s25, [#allocation5]
    $region5: #{_ebm_forward.1} parent=1 // pred_fallthru
      _
    // Predicated region
    $region6: #{_ebm_forward.1} parent=1 // pred_check
      _
    $region7: #{_ebm_forward.1} parent=1 // pred_check_branch
      %29 = sbr.rel (0) target = $region9
    $region8: #{_ebm_forward.1} parent=1 // pred_region
      %s30 = sld [smem:[#allocation3]]
      %s32 = ssub.s32 16384, 16384
      %33 = vsyncadd [#allocation7], %s32
      %s34 = smul.addr %s30, 256
      %s35 = smul.addr %s34, 64
      %s36 = scalar_lea.hbm %s2, %s35
      %s37 = sshll.u32 [#allocation6], 4
      %s38 = int_to_ptr.vmem [resolvable:$true] %s37
      %43 = dma.hbm_to_vmem [thread:$0]  %s36, 16384, %s38, [#allocation7], 256, 256, 16
    $region9: #{_ebm_forward.1} parent=1 // pred_fallthru
      _
    // Predicated region
    $region10: #{_ebm_forward.1} parent=1 // pred_check
      _
    $region11: #{_ebm_forward.1} parent=1 // pred_check_branch
      %45 = sbr.rel (0) target = $region13
    $region12: #{_ebm_forward.1} parent=1 // pred_region
      %s46 = sld [smem:[#allocation3]]
      %s48 = ssub.s32 64, 64
      %49 = vsyncadd [#allocation7], %s48
      %s50 = smul.addr %s46, 4
      %s51 = smul.addr %s50, 16
      %s52 = scalar_lea.hbm %s3, %s51
      %s54 = sshll.u32 [#allocation8], 4
      %s55 = int_to_ptr.vmem [resolvable:$true] %s54
      %57 = dma.hbm_to_vmem [thread:$0]  %s52, 64, %s55, [#allocation7]
    $region13: #{_ebm_forward.1} parent=1 // pred_fallthru
      _
    // Predicated region
    $region14: #{_ebm_forward.1} parent=1 // pred_check
      _
    $region15: #{_ebm_forward.1} parent=1 // pred_check_branch
      %59 = sbr.rel (0) target = $region17
    $region16: #{_ebm_forward.1} parent=1 // pred_region
      %s60 = sld [smem:[#allocation3]]
      %s62 = ssub.s32 4096, 4096
      %63 = vsyncadd [#allocation10], %s62
      %s64 = smul.addr %s60, 64
      %s65 = smul.addr %s64, 64
      %s66 = scalar_lea.hbm %s4, %s65
      %s67 = sshll.u32 [#allocation9], 4
      %s68 = int_to_ptr.vmem [resolvable:$true] %s67
      %73 = dma.hbm_to_vmem [thread:$0]  %s66, 4096, %s68, [#allocation10], 64, 64, 4
    $region17: #{_ebm_forward.1} parent=1 // pred_fallthru
      _
    // Predicated region
    $region18: #{_ebm_forward.1} parent=1 // pred_check
      _
    $region19: #{_ebm_forward.1} parent=1 // pred_check_branch
      %75 = sbr.rel (0) target = $region21
    $region20: #{_ebm_forward.1} parent=1 // pred_region
      %s76 = sld [smem:[#allocation3]]
      %s78 = ssub.s32 16, 16
      %79 = vsyncadd [#allocation10], %s78
      %s80 = smul.addr %s76, 16
      %s81 = scalar_lea.hbm %s5, %s80
      %s83 = sshll.u32 [#allocation11], 4
      %s84 = int_to_ptr.vmem [resolvable:$true] %s83
      %86 = dma.hbm_to_vmem [thread:$0]  %s81, 16, %s84, [#allocation10]
    $region21: #{_ebm_forward.1} parent=1 // pred_fallthru
      _
    // Predicated region
    $region22: #{_ebm_forward.1} parent=1 // pred_check
      _
    $region23: #{_ebm_forward.1} parent=1 // pred_check_branch
      %88 = sbr.rel (0) target = $region25
    $region24: #{_ebm_forward.1} parent=1 // pred_region
      %s89 = sld [smem:[#allocation3]]
      %s91 = ssub.s32 16, 16
      %92 = vsyncadd [#allocation13], %s91
      %s93 = smul.addr %s89, 16
      %s94 = scalar_lea.hbm %s6, %s93
      %s96 = sshll.u32 [#allocation12], 4
      %s97 = int_to_ptr.vmem [resolvable:$true] %s96
      %99 = dma.hbm_to_vmem [thread:$0]  %s94, 16, %s97, [#allocation13]
    $region25: #{_ebm_forward.1} parent=1 // pred_fallthru
      _
    // Predicated region
    $region26: #{_ebm_forward.1} parent=1 // pred_check
      _
    $region27: #{_ebm_forward.1} parent=1 // pred_check_branch
      %101 = sbr.rel (0) target = $region29
    $region28: #{_ebm_forward.1} parent=1 // pred_region
      %s102 = sld [smem:[#allocation3]]
      %p103 = scmp.lt.s32.totalorder %s102, 2
      %s104 = scalar_select %p103, %s102, 2
      %s105 = scalar_lea.vmem %s7, %s104
      %s106 = sld [smem:[#allocation3]]
    $region29: #{_ebm_forward.1} parent=1 // pred_fallthru
      _
    // Predicated region
    $region30: #{_ebm_forward.1} parent=1 // pred_check
      _
    $region31: #{_ebm_forward.1} parent=1 // pred_check_branch
      %108 = sbr.rel (0) target = $region33
    $region32: #{_ebm_forward.1} parent=1 // pred_region
      %109 = dma.done [#allocation5], 512
    $region33: #{_ebm_forward.1} parent=1 // pred_fallthru
      _
    // Predicated region
    $region34: #{_ebm_forward.1} parent=1 // pred_check
      _
    $region35: #{_ebm_forward.1} parent=1 // pred_check_branch
      %111 = sbr.rel (0) target = $region37
    $region36: #{_ebm_forward.1} parent=1 // pred_region
      %112 = dma.done [#allocation7], 16384
    $region37: #{_ebm_forward.1} parent=1 // pred_fallthru
      _
    // Predicated region
    $region38: #{_ebm_forward.1} parent=1 // pred_check
      _
    $region39: #{_ebm_forward.1} parent=1 // pred_check_branch
      %114 = sbr.rel (0) target = $region41
    $region40: #{_ebm_forward.1} parent=1 // pred_region
      %115 = dma.done [#allocation7], 64
    $region41: #{_ebm_forward.1} parent=1 // pred_fallthru
      _
    // Predicated region
    $region42: #{_ebm_forward.1} parent=1 // pred_check
      _
    $region43: #{_ebm_forward.1} parent=1 // pred_check_branch
      %117 = sbr.rel (0) target = $region45
    $region44: #{_ebm_forward.1} parent=1 // pred_region
      %118 = dma.done [#allocation10], 4096
    $region45: #{_ebm_forward.1} parent=1 // pred_fallthru
      _
    // Predicated region
    $region46: #{_ebm_forward.1} parent=1 // pred_check
      _
    $region47: #{_ebm_forward.1} parent=1 // pred_check_branch
      %120 = sbr.rel (0) target = $region49
    $region48: #{_ebm_forward.1} parent=1 // pred_region
      %121 = dma.done [#allocation10], 16
    $region49: #{_ebm_forward.1} parent=1 // pred_fallthru
      _
    // Predicated region
    $region50: #{_ebm_forward.1} parent=1 // pred_check
      _
    $region51: #{_ebm_forward.1} parent=1 // pred_check_branch
      %123 = sbr.rel (0) target = $region53
    $region52: #{_ebm_forward.1} parent=1 // pred_region
      %124 = dma.done [#allocation13], 16
    $region53: #{_ebm_forward.1} parent=1 // pred_fallthru
      _
    %s125 = sld [smem:[#allocation3]]
    %p126 = scmp.lt.s32.totalorder %s125, 2
    %s127 = scalar_select %p126, %s125, 2
    %s128 = scalar_lea.vmem %s7, %s127
    %s129 = sld [smem:[#allocation3]]
    %s130 = sld [smem:[#allocation3]]
    %s131 = sld [smem:[#allocation3]]
    %s132 = sld [smem:[#allocation3]]
    %s133 = sld [smem:[#allocation3]]
    %s134 = sld [smem:[#allocation3]]
    %p135 = scmp.lt.s32.totalorder %s134, 2
    %s136 = scalar_select %p135, %s134, 2
    %s137 = scalar_lea.vmem %s7, %s136
    %s138 = sld [smem:[#allocation3]]
    %v140 = vld [vmem:[#allocation4] sm:$0xff]
    %v141 = vld [vmem:[#allocation4 + $0x8] sm:$0xff]
    %v142 = vld [vmem:[#allocation4 + $0x10] sm:$0xff]
    %v143 = vld [vmem:[#allocation4 + $0x18] sm:$0xff]
    %v144 = vtanh.pop %v140
    %v145 = vtanh.pop %v141
    %v146 = vtanh.pop %v142
    %v147 = vtanh.pop %v143
    %v148 = vpack.c.bf16 %v144, %v144
    %v149 = vpack.c.bf16 %v145, %v145
    %v150 = vpack.c.bf16 %v146, %v146
    %v151 = vpack.c.bf16 %v147, %v147
    %v152 = vld [vmem:[#allocation6] sm:$0xff]
    %v153 = vld [vmem:[#allocation6 + $0x8] sm:$0xff]
    %v154 = vld [vmem:[#allocation6 + $0x10] sm:$0xff]
    %v155 = vld [vmem:[#allocation6 + $0x18] sm:$0xff]
    %v156 = vld [vmem:[#allocation6 + $0x20] sm:$0xff]
    %v157 = vld [vmem:[#allocation6 + $0x28] sm:$0xff]
    %v158 = vld [vmem:[#allocation6 + $0x30] sm:$0xff]
    %v159 = vld [vmem:[#allocation6 + $0x38] sm:$0xff]
    %v160 = vld [vmem:[#allocation6 + $0x40] sm:$0xff]
    %v161 = vld [vmem:[#allocation6 + $0x48] sm:$0xff]
    %v162 = vld [vmem:[#allocation6 + $0x50] sm:$0xff]
    %v163 = vld [vmem:[#allocation6 + $0x58] sm:$0xff]
    %v164 = vld [vmem:[#allocation6 + $0x60] sm:$0xff]
    %v165 = vld [vmem:[#allocation6 + $0x68] sm:$0xff]
    %v166 = vld [vmem:[#allocation6 + $0x70] sm:$0xff]
    %v167 = vld [vmem:[#allocation6 + $0x78] sm:$0xff]
    %v168 = vld [vmem:[#allocation6 + $0x80] sm:$0xff]
    %v169 = vld [vmem:[#allocation6 + $0x88] sm:$0xff]
    %v170 = vld [vmem:[#allocation6 + $0x90] sm:$0xff]
    %v171 = vld [vmem:[#allocation6 + $0x98] sm:$0xff]
    %v172 = vld [vmem:[#allocation6 + $0xa0] sm:$0xff]
    %v173 = vld [vmem:[#allocation6 + $0xa8] sm:$0xff]
    %v174 = vld [vmem:[#allocation6 + $0xb0] sm:$0xff]
    %v175 = vld [vmem:[#allocation6 + $0xb8] sm:$0xff]
    %v176 = vld [vmem:[#allocation6 + $0xc0] sm:$0xff]
    %v177 = vld [vmem:[#allocation6 + $0xc8] sm:$0xff]
    %v178 = vld [vmem:[#allocation6 + $0xd0] sm:$0xff]
    %v179 = vld [vmem:[#allocation6 + $0xd8] sm:$0xff]
    %v180 = vld [vmem:[#allocation6 + $0xe0] sm:$0xff]
    %v181 = vld [vmem:[#allocation6 + $0xe8] sm:$0xff]
    %v182 = vld [vmem:[#allocation6 + $0xf0] sm:$0xff]
    %v183 = vld [vmem:[#allocation6 + $0xf8] sm:$0xff]
    %v184 = vld [vmem:[#allocation6 + $0x100] sm:$0xff]
    %v185 = vld [vmem:[#allocation6 + $0x108] sm:$0xff]
    %v186 = vld [vmem:[#allocation6 + $0x110] sm:$0xff]
    %v187 = vld [vmem:[#allocation6 + $0x118] sm:$0xff]
    %v188 = vld [vmem:[#allocation6 + $0x120] sm:$0xff]
    %v189 = vld [vmem:[#allocation6 + $0x128] sm:$0xff]
    %v190 = vld [vmem:[#allocation6 + $0x130] sm:$0xff]
    %v191 = vld [vmem:[#allocation6 + $0x138] sm:$0xff]
    %v192 = vld [vmem:[#allocation6 + $0x140] sm:$0xff]
    %v193 = vld [vmem:[#allocation6 + $0x148] sm:$0xff]
    %v194 = vld [vmem:[#allocation6 + $0x150] sm:$0xff]
    %v195 = vld [vmem:[#allocation6 + $0x158] sm:$0xff]
    %v196 = vld [vmem:[#allocation6 + $0x160] sm:$0xff]
    %v197 = vld [vmem:[#allocation6 + $0x168] sm:$0xff]
    %v198 = vld [vmem:[#allocation6 + $0x170] sm:$0xff]
    %v199 = vld [vmem:[#allocation6 + $0x178] sm:$0xff]
    %v200 = vld [vmem:[#allocation6 + $0x180] sm:$0xff]
    %v201 = vld [vmem:[#allocation6 + $0x188] sm:$0xff]
    %v202 = vld [vmem:[#allocation6 + $0x190] sm:$0xff]
    %v203 = vld [vmem:[#allocation6 + $0x198] sm:$0xff]
    %v204 = vld [vmem:[#allocation6 + $0x1a0] sm:$0xff]
    %v205 = vld [vmem:[#allocation6 + $0x1a8] sm:$0xff]
    %v206 = vld [vmem:[#allocation6 + $0x1b0] sm:$0xff]
    %v207 = vld [vmem:[#allocation6 + $0x1b8] sm:$0xff]
    %v208 = vld [vmem:[#allocation6 + $0x1c0] sm:$0xff]
    %v209 = vld [vmem:[#allocation6 + $0x1c8] sm:$0xff]
    %v210 = vld [vmem:[#allocation6 + $0x1d0] sm:$0xff]
    %v211 = vld [vmem:[#allocation6 + $0x1d8] sm:$0xff]
    %v212 = vld [vmem:[#allocation6 + $0x1e0] sm:$0xff]
    %v213 = vld [vmem:[#allocation6 + $0x1e8] sm:$0xff]
    %v214 = vld [vmem:[#allocation6 + $0x1f0] sm:$0xff]
    %v215 = vld [vmem:[#allocation6 + $0x1f8] sm:$0xff]
    %v216 = vld [vmem:[#allocation6 + $0x200] sm:$0xff]
    %v217 = vld [vmem:[#allocation6 + $0x208] sm:$0xff]
    %v218 = vld [vmem:[#allocation6 + $0x210] sm:$0xff]
    %v219 = vld [vmem:[#allocation6 + $0x218] sm:$0xff]
    %v220 = vld [vmem:[#allocation6 + $0x220] sm:$0xff]
    %v221 = vld [vmem:[#allocation6 + $0x228] sm:$0xff]
    %v222 = vld [vmem:[#allocation6 + $0x230] sm:$0xff]
    %v223 = vld [vmem:[#allocation6 + $0x238] sm:$0xff]
    %v224 = vld [vmem:[#allocation6 + $0x240] sm:$0xff]
    %v225 = vld [vmem:[#allocation6 + $0x248] sm:$0xff]
    %v226 = vld [vmem:[#allocation6 + $0x250] sm:$0xff]
    %v227 = vld [vmem:[#allocation6 + $0x258] sm:$0xff]
    %v228 = vld [vmem:[#allocation6 + $0x260] sm:$0xff]
    %v229 = vld [vmem:[#allocation6 + $0x268] sm:$0xff]
    %v230 = vld [vmem:[#allocation6 + $0x270] sm:$0xff]
    %v231 = vld [vmem:[#allocation6 + $0x278] sm:$0xff]
    %v232 = vld [vmem:[#allocation6 + $0x280] sm:$0xff]
    %v233 = vld [vmem:[#allocation6 + $0x288] sm:$0xff]
    %v234 = vld [vmem:[#allocation6 + $0x290] sm:$0xff]
    %v235 = vld [vmem:[#allocation6 + $0x298] sm:$0xff]
    %v236 = vld [vmem:[#allocation6 + $0x2a0] sm:$0xff]
    %v237 = vld [vmem:[#allocation6 + $0x2a8] sm:$0xff]
    %v238 = vld [vmem:[#allocation6 + $0x2b0] sm:$0xff]
    %v239 = vld [vmem:[#allocation6 + $0x2b8] sm:$0xff]
    %v240 = vld [vmem:[#allocation6 + $0x2c0] sm:$0xff]
    %v241 = vld [vmem:[#allocation6 + $0x2c8] sm:$0xff]
    %v242 = vld [vmem:[#allocation6 + $0x2d0] sm:$0xff]
    %v243 = vld [vmem:[#allocation6 + $0x2d8] sm:$0xff]
    %v244 = vld [vmem:[#allocation6 + $0x2e0] sm:$0xff]
    %v245 = vld [vmem:[#allocation6 + $0x2e8] sm:$0xff]
    %v246 = vld [vmem:[#allocation6 + $0x2f0] sm:$0xff]
    %v247 = vld [vmem:[#allocation6 + $0x2f8] sm:$0xff]
    %v248 = vld [vmem:[#allocation6 + $0x300] sm:$0xff]
    %v249 = vld [vmem:[#allocation6 + $0x308] sm:$0xff]
    %v250 = vld [vmem:[#allocation6 + $0x310] sm:$0xff]
    %v251 = vld [vmem:[#allocation6 + $0x318] sm:$0xff]
    %v252 = vld [vmem:[#allocation6 + $0x320] sm:$0xff]
    %v253 = vld [vmem:[#allocation6 + $0x328] sm:$0xff]
    %v254 = vld [vmem:[#allocation6 + $0x330] sm:$0xff]
    %v255 = vld [vmem:[#allocation6 + $0x338] sm:$0xff]
    %v256 = vld [vmem:[#allocation6 + $0x340] sm:$0xff]
    %v257 = vld [vmem:[#allocation6 + $0x348] sm:$0xff]
    %v258 = vld [vmem:[#allocation6 + $0x350] sm:$0xff]
    %v259 = vld [vmem:[#allocation6 + $0x358] sm:$0xff]
    %v260 = vld [vmem:[#allocation6 + $0x360] sm:$0xff]
    %v261 = vld [vmem:[#allocation6 + $0x368] sm:$0xff]
    %v262 = vld [vmem:[#allocation6 + $0x370] sm:$0xff]
    %v263 = vld [vmem:[#allocation6 + $0x378] sm:$0xff]
    %v264 = vld [vmem:[#allocation6 + $0x380] sm:$0xff]
    %v265 = vld [vmem:[#allocation6 + $0x388] sm:$0xff]
    %v266 = vld [vmem:[#allocation6 + $0x390] sm:$0xff]
    %v267 = vld [vmem:[#allocation6 + $0x398] sm:$0xff]
    %v268 = vld [vmem:[#allocation6 + $0x3a0] sm:$0xff]
    %v269 = vld [vmem:[#allocation6 + $0x3a8] sm:$0xff]
    %v270 = vld [vmem:[#allocation6 + $0x3b0] sm:$0xff]
    %v271 = vld [vmem:[#allocation6 + $0x3b8] sm:$0xff]
    %v272 = vld [vmem:[#allocation6 + $0x3c0] sm:$0xff]
    %v273 = vld [vmem:[#allocation6 + $0x3c8] sm:$0xff]
    %v274 = vld [vmem:[#allocation6 + $0x3d0] sm:$0xff]
    %v275 = vld [vmem:[#allocation6 + $0x3d8] sm:$0xff]
    %v276 = vld [vmem:[#allocation6 + $0x3e0] sm:$0xff]
    %v277 = vld [vmem:[#allocation6 + $0x3e8] sm:$0xff]
    %v278 = vld [vmem:[#allocation6 + $0x3f0] sm:$0xff]
    %v279 = vld [vmem:[#allocation6 + $0x3f8] sm:$0xff]
    %v280 = vld [vmem:[#allocation8] sm:$0xf]
    %v282 = vlaneseq
    %v283 = vshrl.u32 %v282, 7
    %v284 = vsub.s32 0, %v283
    %v285 = vrot.slane %v280, %v284
    %v286 = vlaneseq
    %v287 = vshrl.u32 %v286, 7
    %v288 = vsub.s32 1, %v287
    %v289 = vrot.slane %v280, %v288
    %v290 = vlaneseq
    %v291 = vshrl.u32 %v290, 7
    %v292 = vsub.s32 2, %v291
    %v293 = vrot.slane %v280, %v292
    %v294 = vlaneseq
    %v295 = vshrl.u32 %v294, 7
    %v296 = vsub.s32 3, %v295
    %v297 = vrot.slane %v280, %v296
    %v430 = vunpack.c.l.b16 %v152
    %v431 = vunpack.c.h.b16 %v152
    %v432 = vunpack.c.l.b16 %v153
    %v433 = vunpack.c.h.b16 %v153
    %v434 = vunpack.c.l.b16 %v154
    %v435 = vunpack.c.h.b16 %v154
    %v436 = vunpack.c.l.b16 %v155
    %v437 = vunpack.c.h.b16 %v155
    %v438 = vunpack.c.l.b16 %v156
    %v439 = vunpack.c.h.b16 %v156
    %v440 = vunpack.c.l.b16 %v157
    %v441 = vunpack.c.h.b16 %v157
    %v442 = vunpack.c.l.b16 %v158
    %v443 = vunpack.c.h.b16 %v158
    %v444 = vunpack.c.l.b16 %v159
    %v445 = vunpack.c.h.b16 %v159
    %v446 = vunpack.c.l.b16 %v160
    %v447 = vunpack.c.h.b16 %v160
    %v448 = vunpack.c.l.b16 %v161
    %v449 = vunpack.c.h.b16 %v161
    %v450 = vunpack.c.l.b16 %v162
    %v451 = vunpack.c.h.b16 %v162
    %v452 = vunpack.c.l.b16 %v163
    %v453 = vunpack.c.h.b16 %v163
    %v454 = vunpack.c.l.b16 %v164
    %v455 = vunpack.c.h.b16 %v164
    %v456 = vunpack.c.l.b16 %v165
    %v457 = vunpack.c.h.b16 %v165
    %v458 = vunpack.c.l.b16 %v166
    %v459 = vunpack.c.h.b16 %v166
    %v460 = vunpack.c.l.b16 %v167
    %v461 = vunpack.c.h.b16 %v167
    %v462 = vunpack.c.l.b16 %v168
    %v463 = vunpack.c.h.b16 %v168
    %v464 = vunpack.c.l.b16 %v169
    %v465 = vunpack.c.h.b16 %v169
    %v466 = vunpack.c.l.b16 %v170
    %v467 = vunpack.c.h.b16 %v170
    %v468 = vunpack.c.l.b16 %v171
    %v469 = vunpack.c.h.b16 %v171
    %v470 = vunpack.c.l.b16 %v172
    %v471 = vunpack.c.h.b16 %v172
    %v472 = vunpack.c.l.b16 %v173
    %v473 = vunpack.c.h.b16 %v173
    %v474 = vunpack.c.l.b16 %v174
    %v475 = vunpack.c.h.b16 %v174
    %v476 = vunpack.c.l.b16 %v175
    %v477 = vunpack.c.h.b16 %v175
    %v478 = vunpack.c.l.b16 %v176
    %v479 = vunpack.c.h.b16 %v176
    %v480 = vunpack.c.l.b16 %v177
    %v481 = vunpack.c.h.b16 %v177
    %v482 = vunpack.c.l.b16 %v178
    %v483 = vunpack.c.h.b16 %v178
    %v484 = vunpack.c.l.b16 %v179
    %v485 = vunpack.c.h.b16 %v179
    %v486 = vunpack.c.l.b16 %v180
    %v487 = vunpack.c.h.b16 %v180
    %v488 = vunpack.c.l.b16 %v181
    %v489 = vunpack.c.h.b16 %v181
    %v490 = vunpack.c.l.b16 %v182
    %v491 = vunpack.c.h.b16 %v182
    %v492 = vunpack.c.l.b16 %v183
    %v493 = vunpack.c.h.b16 %v183
    %v494 = vunpack.c.l.b16 %v184
    %v495 = vunpack.c.h.b16 %v184
    %v496 = vunpack.c.l.b16 %v185
    %v497 = vunpack.c.h.b16 %v185
    %v498 = vunpack.c.l.b16 %v186
    %v499 = vunpack.c.h.b16 %v186
    %v500 = vunpack.c.l.b16 %v187
    %v501 = vunpack.c.h.b16 %v187
    %v502 = vunpack.c.l.b16 %v188
    %v503 = vunpack.c.h.b16 %v188
    %v504 = vunpack.c.l.b16 %v189
    %v505 = vunpack.c.h.b16 %v189
    %v506 = vunpack.c.l.b16 %v190
    %v507 = vunpack.c.h.b16 %v190
    %v508 = vunpack.c.l.b16 %v191
    %v509 = vunpack.c.h.b16 %v191
    %v510 = vunpack.c.l.b16 %v192
    %v511 = vunpack.c.h.b16 %v192
    %v512 = vunpack.c.l.b16 %v193
    %v513 = vunpack.c.h.b16 %v193
    %v514 = vunpack.c.l.b16 %v194
    %v515 = vunpack.c.h.b16 %v194
    %v516 = vunpack.c.l.b16 %v195
    %v517 = vunpack.c.h.b16 %v195
    %v518 = vunpack.c.l.b16 %v196
    %v519 = vunpack.c.h.b16 %v196
    %v520 = vunpack.c.l.b16 %v197
    %v521 = vunpack.c.h.b16 %v197
    %v522 = vunpack.c.l.b16 %v198
    %v523 = vunpack.c.h.b16 %v198
    %v524 = vunpack.c.l.b16 %v199
    %v525 = vunpack.c.h.b16 %v199
    %v526 = vunpack.c.l.b16 %v200
    %v527 = vunpack.c.h.b16 %v200
    %v528 = vunpack.c.l.b16 %v201
    %v529 = vunpack.c.h.b16 %v201
    %v530 = vunpack.c.l.b16 %v202
    %v531 = vunpack.c.h.b16 %v202
    %v532 = vunpack.c.l.b16 %v203
    %v533 = vunpack.c.h.b16 %v203
    %v534 = vunpack.c.l.b16 %v204
    %v535 = vunpack.c.h.b16 %v204
    %v536 = vunpack.c.l.b16 %v205
    %v537 = vunpack.c.h.b16 %v205
    %v538 = vunpack.c.l.b16 %v206
    %v539 = vunpack.c.h.b16 %v206
    %v540 = vunpack.c.l.b16 %v207
    %v541 = vunpack.c.h.b16 %v207
    %v542 = vunpack.c.l.b16 %v208
    %v543 = vunpack.c.h.b16 %v208
    %v544 = vunpack.c.l.b16 %v209
    %v545 = vunpack.c.h.b16 %v209
    %v546 = vunpack.c.l.b16 %v210
    %v547 = vunpack.c.h.b16 %v210
    %v548 = vunpack.c.l.b16 %v211
    %v549 = vunpack.c.h.b16 %v211
    %v550 = vunpack.c.l.b16 %v212
    %v551 = vunpack.c.h.b16 %v212
    %v552 = vunpack.c.l.b16 %v213
    %v553 = vunpack.c.h.b16 %v213
    %v554 = vunpack.c.l.b16 %v214
    %v555 = vunpack.c.h.b16 %v214
    %v556 = vunpack.c.l.b16 %v215
    %v557 = vunpack.c.h.b16 %v215
    %v558 = vunpack.c.l.b16 %v216
    %v559 = vunpack.c.h.b16 %v216
    %v560 = vunpack.c.l.b16 %v217
    %v561 = vunpack.c.h.b16 %v217
    %v562 = vunpack.c.l.b16 %v218
    %v563 = vunpack.c.h.b16 %v218
    %v564 = vunpack.c.l.b16 %v219
    %v565 = vunpack.c.h.b16 %v219
    %v566 = vunpack.c.l.b16 %v220
    %v567 = vunpack.c.h.b16 %v220
    %v568 = vunpack.c.l.b16 %v221
    %v569 = vunpack.c.h.b16 %v221
    %v570 = vunpack.c.l.b16 %v222
    %v571 = vunpack.c.h.b16 %v222
    %v572 = vunpack.c.l.b16 %v223
    %v573 = vunpack.c.h.b16 %v223
    %v574 = vunpack.c.l.b16 %v224
    %v575 = vunpack.c.h.b16 %v224
    %v576 = vunpack.c.l.b16 %v225
    %v577 = vunpack.c.h.b16 %v225
    %v578 = vunpack.c.l.b16 %v226
    %v579 = vunpack.c.h.b16 %v226
    %v580 = vunpack.c.l.b16 %v227
    %v581 = vunpack.c.h.b16 %v227
    %v582 = vunpack.c.l.b16 %v228
    %v583 = vunpack.c.h.b16 %v228
    %v584 = vunpack.c.l.b16 %v229
    %v585 = vunpack.c.h.b16 %v229
    %v586 = vunpack.c.l.b16 %v230
    %v587 = vunpack.c.h.b16 %v230
    %v588 = vunpack.c.l.b16 %v231
    %v589 = vunpack.c.h.b16 %v231
    %v590 = vunpack.c.l.b16 %v232
    %v591 = vunpack.c.h.b16 %v232
    %v592 = vunpack.c.l.b16 %v233
    %v593 = vunpack.c.h.b16 %v233
    %v594 = vunpack.c.l.b16 %v234
    %v595 = vunpack.c.h.b16 %v234
    %v596 = vunpack.c.l.b16 %v235
    %v597 = vunpack.c.h.b16 %v235
    %v598 = vunpack.c.l.b16 %v236
    %v599 = vunpack.c.h.b16 %v236
    %v600 = vunpack.c.l.b16 %v237
    %v601 = vunpack.c.h.b16 %v237
    %v602 = vunpack.c.l.b16 %v238
    %v603 = vunpack.c.h.b16 %v238
    %v604 = vunpack.c.l.b16 %v239
    %v605 = vunpack.c.h.b16 %v239
    %v606 = vunpack.c.l.b16 %v240
    %v607 = vunpack.c.h.b16 %v240
    %v608 = vunpack.c.l.b16 %v241
    %v609 = vunpack.c.h.b16 %v241
    %v610 = vunpack.c.l.b16 %v242
    %v611 = vunpack.c.h.b16 %v242
    %v612 = vunpack.c.l.b16 %v243
    %v613 = vunpack.c.h.b16 %v243
    %v614 = vunpack.c.l.b16 %v244
    %v615 = vunpack.c.h.b16 %v244
    %v616 = vunpack.c.l.b16 %v245
    %v617 = vunpack.c.h.b16 %v245
    %v618 = vunpack.c.l.b16 %v246
    %v619 = vunpack.c.h.b16 %v246
    %v620 = vunpack.c.l.b16 %v247
    %v621 = vunpack.c.h.b16 %v247
    %v622 = vunpack.c.l.b16 %v248
    %v623 = vunpack.c.h.b16 %v248
    %v624 = vunpack.c.l.b16 %v249
    %v625 = vunpack.c.h.b16 %v249
    %v626 = vunpack.c.l.b16 %v250
    %v627 = vunpack.c.h.b16 %v250
    %v628 = vunpack.c.l.b16 %v251
    %v629 = vunpack.c.h.b16 %v251
    %v630 = vunpack.c.l.b16 %v252
    %v631 = vunpack.c.h.b16 %v252
    %v632 = vunpack.c.l.b16 %v253
    %v633 = vunpack.c.h.b16 %v253
    %v634 = vunpack.c.l.b16 %v254
    %v635 = vunpack.c.h.b16 %v254
    %v636 = vunpack.c.l.b16 %v255
    %v637 = vunpack.c.h.b16 %v255
    %v638 = vunpack.c.l.b16 %v256
    %v639 = vunpack.c.h.b16 %v256
    %v640 = vunpack.c.l.b16 %v257
    %v641 = vunpack.c.h.b16 %v257
    %v642 = vunpack.c.l.b16 %v258
    %v643 = vunpack.c.h.b16 %v258
    %v644 = vunpack.c.l.b16 %v259
    %v645 = vunpack.c.h.b16 %v259
    %v646 = vunpack.c.l.b16 %v260
    %v647 = vunpack.c.h.b16 %v260
    %v648 = vunpack.c.l.b16 %v261
    %v649 = vunpack.c.h.b16 %v261
    %v650 = vunpack.c.l.b16 %v262
    %v651 = vunpack.c.h.b16 %v262
    %v652 = vunpack.c.l.b16 %v263
    %v653 = vunpack.c.h.b16 %v263
    %v654 = vunpack.c.l.b16 %v264
    %v655 = vunpack.c.h.b16 %v264
    %v656 = vunpack.c.l.b16 %v265
    %v657 = vunpack.c.h.b16 %v265
    %v658 = vunpack.c.l.b16 %v266
    %v659 = vunpack.c.h.b16 %v266
    %v660 = vunpack.c.l.b16 %v267
    %v661 = vunpack.c.h.b16 %v267
    %v662 = vunpack.c.l.b16 %v268
    %v663 = vunpack.c.h.b16 %v268
    %v664 = vunpack.c.l.b16 %v269
    %v665 = vunpack.c.h.b16 %v269
    %v666 = vunpack.c.l.b16 %v270
    %v667 = vunpack.c.h.b16 %v270
    %v668 = vunpack.c.l.b16 %v271
    %v669 = vunpack.c.h.b16 %v271
    %v670 = vunpack.c.l.b16 %v272
    %v671 = vunpack.c.h.b16 %v272
    %v672 = vunpack.c.l.b16 %v273
    %v673 = vunpack.c.h.b16 %v273
    %v674 = vunpack.c.l.b16 %v274
    %v675 = vunpack.c.h.b16 %v274
    %v676 = vunpack.c.l.b16 %v275
    %v677 = vunpack.c.h.b16 %v275
    %v678 = vunpack.c.l.b16 %v276
    %v679 = vunpack.c.h.b16 %v276
    %v680 = vunpack.c.l.b16 %v277
    %v681 = vunpack.c.h.b16 %v277
    %v682 = vunpack.c.l.b16 %v278
    %v683 = vunpack.c.h.b16 %v278
    %v684 = vunpack.c.l.b16 %v279
    %v685 = vunpack.c.h.b16 %v279
    %v686 = vpack.c.b16 %v434, %v430
    %v687 = vpack.c.b16 %v435, %v431
    %v688 = vpack.c.b16 %v436, %v432
    %v689 = vpack.c.b16 %v437, %v433
    %v690 = vpack.c.b16 %v442, %v438
    %v691 = vpack.c.b16 %v443, %v439
    %v692 = vpack.c.b16 %v444, %v440
    %v693 = vpack.c.b16 %v445, %v441
    %v694 = vpack.c.b16 %v450, %v446
    %v695 = vpack.c.b16 %v451, %v447
    %v696 = vpack.c.b16 %v452, %v448
    %v697 = vpack.c.b16 %v453, %v449
    %v698 = vpack.c.b16 %v458, %v454
    %v699 = vpack.c.b16 %v459, %v455
    %v700 = vpack.c.b16 %v460, %v456
    %v701 = vpack.c.b16 %v461, %v457
    %v702 = vpack.c.b16 %v466, %v462
    %v703 = vpack.c.b16 %v467, %v463
    %v704 = vpack.c.b16 %v468, %v464
    %v705 = vpack.c.b16 %v469, %v465
    %v706 = vpack.c.b16 %v474, %v470
    %v707 = vpack.c.b16 %v475, %v471
    %v708 = vpack.c.b16 %v476, %v472
    %v709 = vpack.c.b16 %v477, %v473
    %v710 = vpack.c.b16 %v482, %v478
    %v711 = vpack.c.b16 %v483, %v479
    %v712 = vpack.c.b16 %v484, %v480
    %v713 = vpack.c.b16 %v485, %v481
    %v714 = vpack.c.b16 %v490, %v486
    %v715 = vpack.c.b16 %v491, %v487
    %v716 = vpack.c.b16 %v492, %v488
    %v717 = vpack.c.b16 %v493, %v489
    %v718 = vpack.c.b16 %v498, %v494
    %v719 = vpack.c.b16 %v499, %v495
    %v720 = vpack.c.b16 %v500, %v496
    %v721 = vpack.c.b16 %v501, %v497
    %v722 = vpack.c.b16 %v506, %v502
    %v723 = vpack.c.b16 %v507, %v503
    %v724 = vpack.c.b16 %v508, %v504
    %v725 = vpack.c.b16 %v509, %v505
    %v726 = vpack.c.b16 %v514, %v510
    %v727 = vpack.c.b16 %v515, %v511
    %v728 = vpack.c.b16 %v516, %v512
    %v729 = vpack.c.b16 %v517, %v513
    %v730 = vpack.c.b16 %v522, %v518
    %v731 = vpack.c.b16 %v523, %v519
    %v732 = vpack.c.b16 %v524, %v520
    %v733 = vpack.c.b16 %v525, %v521
    %v734 = vpack.c.b16 %v530, %v526
    %v735 = vpack.c.b16 %v531, %v527
    %v736 = vpack.c.b16 %v532, %v528
    %v737 = vpack.c.b16 %v533, %v529
    %v738 = vpack.c.b16 %v538, %v534
    %v739 = vpack.c.b16 %v539, %v535
    %v740 = vpack.c.b16 %v540, %v536
    %v741 = vpack.c.b16 %v541, %v537
    %v742 = vpack.c.b16 %v546, %v542
    %v743 = vpack.c.b16 %v547, %v543
    %v744 = vpack.c.b16 %v548, %v544
    %v745 = vpack.c.b16 %v549, %v545
    %v746 = vpack.c.b16 %v554, %v550
    %v747 = vpack.c.b16 %v555, %v551
    %v748 = vpack.c.b16 %v556, %v552
    %v749 = vpack.c.b16 %v557, %v553
    %v750 = vpack.c.b16 %v562, %v558
    %v751 = vpack.c.b16 %v563, %v559
    %v752 = vpack.c.b16 %v564, %v560
    %v753 = vpack.c.b16 %v565, %v561
    %v754 = vpack.c.b16 %v570, %v566
    %v755 = vpack.c.b16 %v571, %v567
    %v756 = vpack.c.b16 %v572, %v568
    %v757 = vpack.c.b16 %v573, %v569
    %v758 = vpack.c.b16 %v578, %v574
    %v759 = vpack.c.b16 %v579, %v575
    %v760 = vpack.c.b16 %v580, %v576
    %v761 = vpack.c.b16 %v581, %v577
    %v762 = vpack.c.b16 %v586, %v582
    %v763 = vpack.c.b16 %v587, %v583
    %v764 = vpack.c.b16 %v588, %v584
    %v765 = vpack.c.b16 %v589, %v585
    %v766 = vpack.c.b16 %v594, %v590
    %v767 = vpack.c.b16 %v595, %v591
    %v768 = vpack.c.b16 %v596, %v592
    %v769 = vpack.c.b16 %v597, %v593
    %v770 = vpack.c.b16 %v602, %v598
    %v771 = vpack.c.b16 %v603, %v599
    %v772 = vpack.c.b16 %v604, %v600
    %v773 = vpack.c.b16 %v605, %v601
    %v774 = vpack.c.b16 %v610, %v606
    %v775 = vpack.c.b16 %v611, %v607
    %v776 = vpack.c.b16 %v612, %v608
    %v777 = vpack.c.b16 %v613, %v609
    %v778 = vpack.c.b16 %v618, %v614
    %v779 = vpack.c.b16 %v619, %v615
    %v780 = vpack.c.b16 %v620, %v616
    %v781 = vpack.c.b16 %v621, %v617
    %v782 = vpack.c.b16 %v626, %v622
    %v783 = vpack.c.b16 %v627, %v623
    %v784 = vpack.c.b16 %v628, %v624
    %v785 = vpack.c.b16 %v629, %v625
    %v786 = vpack.c.b16 %v634, %v630
    %v787 = vpack.c.b16 %v635, %v631
    %v788 = vpack.c.b16 %v636, %v632
    %v789 = vpack.c.b16 %v637, %v633
    %v790 = vpack.c.b16 %v642, %v638
    %v791 = vpack.c.b16 %v643, %v639
    %v792 = vpack.c.b16 %v644, %v640
    %v793 = vpack.c.b16 %v645, %v641
    %v794 = vpack.c.b16 %v650, %v646
    %v795 = vpack.c.b16 %v651, %v647
    %v796 = vpack.c.b16 %v652, %v648
    %v797 = vpack.c.b16 %v653, %v649
    %v798 = vpack.c.b16 %v658, %v654
    %v799 = vpack.c.b16 %v659, %v655
    %v800 = vpack.c.b16 %v660, %v656
    %v801 = vpack.c.b16 %v661, %v657
    %v802 = vpack.c.b16 %v666, %v662
    %v803 = vpack.c.b16 %v667, %v663
    %v804 = vpack.c.b16 %v668, %v664
    %v805 = vpack.c.b16 %v669, %v665
    %v806 = vpack.c.b16 %v674, %v670
    %v807 = vpack.c.b16 %v675, %v671
    %v808 = vpack.c.b16 %v676, %v672
    %v809 = vpack.c.b16 %v677, %v673
    %v810 = vpack.c.b16 %v682, %v678
    %v811 = vpack.c.b16 %v683, %v679
    %v812 = vpack.c.b16 %v684, %v680
    %v813 = vpack.c.b16 %v685, %v681
    %942 = vmatprep.subr.bf16.mxu0 %v687
    %943 = vmatpush1.bf16.msra.mxu0 %v686
    %944 = vmatprep.subr.bf16.mxu0 %v691
    %945 = vmatpush1.bf16.msra.mxu0 %v690
    %946 = vmatprep.subr.bf16.mxu0 %v695
    %947 = vmatpush1.bf16.msra.mxu0 %v694
    %948 = vmatprep.subr.bf16.mxu0 %v699
    %949 = vmatpush1.bf16.msra.mxu0 %v698
    %950 = vmatprep.subr.bf16.mxu0 %v703
    %951 = vmatpush1.bf16.msra.mxu0 %v702
    %952 = vmatprep.subr.bf16.mxu0 %v707
    %953 = vmatpush1.bf16.msra.mxu0 %v706
    %954 = vmatprep.subr.bf16.mxu0 %v711
    %955 = vmatpush1.bf16.msra.mxu0 %v710
    %956 = vmatprep.subr.bf16.mxu0 %v715
    %957 = vmatpush1.bf16.msra.mxu0 %v714
    %958 = vmatprep.subr.bf16.mxu0 %v719
    %959 = vmatpush1.bf16.msra.mxu0 %v718
    %960 = vmatprep.subr.bf16.mxu0 %v723
    %961 = vmatpush1.bf16.msra.mxu0 %v722
    %962 = vmatprep.subr.bf16.mxu0 %v727
    %963 = vmatpush1.bf16.msra.mxu0 %v726
    %964 = vmatprep.subr.bf16.mxu0 %v731
    %965 = vmatpush1.bf16.msra.mxu0 %v730
    %966 = vmatprep.subr.bf16.mxu0 %v735
    %967 = vmatpush1.bf16.msra.mxu0 %v734
    %968 = vmatprep.subr.bf16.mxu0 %v739
    %969 = vmatpush1.bf16.msra.mxu0 %v738
    %970 = vmatprep.subr.bf16.mxu0 %v743
    %971 = vmatpush1.bf16.msra.mxu0 %v742
    %972 = vmatprep.subr.bf16.mxu0 %v747
    %973 = vmatpush1.bf16.msra.mxu0 %v746
    %974 = vmatprep.mubr.bf16.mxu0 %v149
    %975 = vmatmul.mubr.bf16.gmra.mrb[0].mxu0 %v148
    %v976 = vpop.f32.mrb[0].mxu0
    %v977 = vadd.f32 %v285, %v976
    %v978 = vpop.f32.mrb[0].mxu0
    %v979 = vadd.f32 %v289, %v978
    %v980 = vpop.f32.mrb[0].mxu0
    %v981 = vpop.f32.mrb[0].mxu0
    %982 = vdwg.mxu0
    %983 = vmatprep.subr.bf16.mxu0 %v751
    %984 = vmatpush1.bf16.msra.mxu0 %v750
    %985 = vmatprep.subr.bf16.mxu0 %v755
    %986 = vmatpush1.bf16.msra.mxu0 %v754
    %987 = vmatprep.subr.bf16.mxu0 %v759
    %988 = vmatpush1.bf16.msra.mxu0 %v758
    %989 = vmatprep.subr.bf16.mxu0 %v763
    %990 = vmatpush1.bf16.msra.mxu0 %v762
    %991 = vmatprep.subr.bf16.mxu0 %v767
    %992 = vmatpush1.bf16.msra.mxu0 %v766
    %993 = vmatprep.subr.bf16.mxu0 %v771
    %994 = vmatpush1.bf16.msra.mxu0 %v770
    %995 = vmatprep.subr.bf16.mxu0 %v775
    %996 = vmatpush1.bf16.msra.mxu0 %v774
    %997 = vmatprep.subr.bf16.mxu0 %v779
    %998 = vmatpush1.bf16.msra.mxu0 %v778
    %999 = vmatprep.subr.bf16.mxu0 %v783
    %1000 = vmatpush1.bf16.msra.mxu0 %v782
    %1001 = vmatprep.subr.bf16.mxu0 %v787
    %1002 = vmatpush1.bf16.msra.mxu0 %v786
    %1003 = vmatprep.subr.bf16.mxu0 %v791
    %1004 = vmatpush1.bf16.msra.mxu0 %v790
    %1005 = vmatprep.subr.bf16.mxu0 %v795
    %1006 = vmatpush1.bf16.msra.mxu0 %v794
    %1007 = vmatprep.subr.bf16.mxu0 %v799
    %1008 = vmatpush1.bf16.msra.mxu0 %v798
    %1009 = vmatprep.subr.bf16.mxu0 %v803
    %1010 = vmatpush1.bf16.msra.mxu0 %v802
    %1011 = vmatprep.subr.bf16.mxu0 %v807
    %1012 = vmatpush1.bf16.msra.mxu0 %v806
    %1013 = vmatprep.subr.bf16.mxu0 %v811
    %1014 = vmatpush1.bf16.msra.mxu0 %v810
    %1015 = vmatprep.mubr.bf16.mxu0 %v151
    %1016 = vmatmul.mubr.bf16.gmra.mrb[0].mxu0 %v150
    %v1017 = vpop.f32.mrb[0].mxu0
    %v1018 = vadd.f32 %v977, %v1017
    %v1019 = vpop.f32.mrb[0].mxu0
    %v1020 = vadd.f32 %v979, %v1019
    %v1021 = vpop.f32.mrb[0].mxu0
    %v1022 = vpop.f32.mrb[0].mxu0
    %1023 = vdwg.mxu0
    %1024 = vmatprep.subr.bf16.mxu0 %v689
    %1025 = vmatpush1.bf16.msra.mxu0 %v688
    %1026 = vmatprep.subr.bf16.mxu0 %v693
    %1027 = vmatpush1.bf16.msra.mxu0 %v692
    %1028 = vmatprep.subr.bf16.mxu0 %v697
    %1029 = vmatpush1.bf16.msra.mxu0 %v696
    %1030 = vmatprep.subr.bf16.mxu0 %v701
    %1031 = vmatpush1.bf16.msra.mxu0 %v700
    %1032 = vmatprep.subr.bf16.mxu0 %v705
    %1033 = vmatpush1.bf16.msra.mxu0 %v704
    %1034 = vmatprep.subr.bf16.mxu0 %v709
    %1035 = vmatpush1.bf16.msra.mxu0 %v708
    %1036 = vmatprep.subr.bf16.mxu0 %v713
    %1037 = vmatpush1.bf16.msra.mxu0 %v712
    %1038 = vmatprep.subr.bf16.mxu0 %v717
    %1039 = vmatpush1.bf16.msra.mxu0 %v716
    %1040 = vmatprep.subr.bf16.mxu0 %v721
    %1041 = vmatpush1.bf16.msra.mxu0 %v720
    %1042 = vmatprep.subr.bf16.mxu0 %v725
    %1043 = vmatpush1.bf16.msra.mxu0 %v724
    %1044 = vmatprep.subr.bf16.mxu0 %v729
    %1045 = vmatpush1.bf16.msra.mxu0 %v728
    %1046 = vmatprep.subr.bf16.mxu0 %v733
    %1047 = vmatpush1.bf16.msra.mxu0 %v732
    %1048 = vmatprep.subr.bf16.mxu0 %v737
    %1049 = vmatpush1.bf16.msra.mxu0 %v736
    %1050 = vmatprep.subr.bf16.mxu0 %v741
    %1051 = vmatpush1.bf16.msra.mxu0 %v740
    %1052 = vmatprep.subr.bf16.mxu0 %v745
    %1053 = vmatpush1.bf16.msra.mxu0 %v744
    %1054 = vmatprep.subr.bf16.mxu0 %v749
    %1055 = vmatpush1.bf16.msra.mxu0 %v748
    %1056 = vmatprep.mubr.bf16.mxu0 %v149
    %1057 = vmatmul.mubr.bf16.gmra.mrb[0].mxu0 %v148
    %v1058 = vpop.f32.mrb[0].mxu0
    %v1059 = vadd.f32 %v293, %v1058
    %v1060 = vpop.f32.mrb[0].mxu0
    %v1061 = vadd.f32 %v297, %v1060
    %v1062 = vpop.f32.mrb[0].mxu0
    %v1063 = vpop.f32.mrb[0].mxu0
    %1064 = vdwg.mxu0
    %1065 = vmatprep.subr.bf16.mxu0 %v753
    %1066 = vmatpush1.bf16.msra.mxu0 %v752
    %1067 = vmatprep.subr.bf16.mxu0 %v757
    %1068 = vmatpush1.bf16.msra.mxu0 %v756
    %1069 = vmatprep.subr.bf16.mxu0 %v761
    %1070 = vmatpush1.bf16.msra.mxu0 %v760
    %1071 = vmatprep.subr.bf16.mxu0 %v765
    %1072 = vmatpush1.bf16.msra.mxu0 %v764
    %1073 = vmatprep.subr.bf16.mxu0 %v769
    %1074 = vmatpush1.bf16.msra.mxu0 %v768
    %1075 = vmatprep.subr.bf16.mxu0 %v773
    %1076 = vmatpush1.bf16.msra.mxu0 %v772
    %1077 = vmatprep.subr.bf16.mxu0 %v777
    %1078 = vmatpush1.bf16.msra.mxu0 %v776
    %1079 = vmatprep.subr.bf16.mxu0 %v781
    %1080 = vmatpush1.bf16.msra.mxu0 %v780
    %1081 = vmatprep.subr.bf16.mxu0 %v785
    %1082 = vmatpush1.bf16.msra.mxu0 %v784
    %1083 = vmatprep.subr.bf16.mxu0 %v789
    %1084 = vmatpush1.bf16.msra.mxu0 %v788
    %1085 = vmatprep.subr.bf16.mxu0 %v793
    %1086 = vmatpush1.bf16.msra.mxu0 %v792
    %1087 = vmatprep.subr.bf16.mxu0 %v797
    %1088 = vmatpush1.bf16.msra.mxu0 %v796
    %1089 = vmatprep.subr.bf16.mxu0 %v801
    %1090 = vmatpush1.bf16.msra.mxu0 %v800
    %1091 = vmatprep.subr.bf16.mxu0 %v805
    %1092 = vmatpush1.bf16.msra.mxu0 %v804
    %1093 = vmatprep.subr.bf16.mxu0 %v809
    %1094 = vmatpush1.bf16.msra.mxu0 %v808
    %1095 = vmatprep.subr.bf16.mxu0 %v813
    %1096 = vmatpush1.bf16.msra.mxu0 %v812
    %1097 = vmatprep.mubr.bf16.mxu0 %v151
    %1098 = vmatmul.mubr.bf16.gmra.mrb[0].mxu0 %v150
    %v1099 = vpop.f32.mrb[0].mxu0
    %v1100 = vadd.f32 %v1059, %v1099
    %v1101 = vpop.f32.mrb[0].mxu0
    %v1102 = vadd.f32 %v1061, %v1101
    %v1103 = vpop.f32.mrb[0].mxu0
    %v1104 = vpop.f32.mrb[0].mxu0
    %1105 = vdwg.mxu0
    %v1106 = vxor.u32 %v1018, 2147483648
    %v1107 = vxor.u32 %v1020, 2147483648
    %v1108 = vxor.u32 %v1100, 2147483648
    %v1109 = vxor.u32 %v1102, 2147483648
    %v1110 = vmul.f32 %v1106, 1.442695
    %v1111 = vpow.pop %v1110
    %v1112 = vmul.f32 %v1107, 1.442695
    %v1113 = vpow.pop %v1112
    %v1114 = vmul.f32 %v1108, 1.442695
    %v1115 = vpow.pop %v1114
    %v1116 = vmul.f32 %v1109, 1.442695
    %v1117 = vpow.pop %v1116
    %v1118 = vadd.f32 %v1111, 1.0
    %v1119 = vadd.f32 %v1113, 1.0
    %v1120 = vadd.f32 %v1115, 1.0
    %v1121 = vadd.f32 %v1117, 1.0
    %v1122 = vrcp.pop %v1118
    %v1123 = vmul.f32 1.0, %v1122
    %v1124 = vrcp.pop %v1119
    %v1125 = vmul.f32 1.0, %v1124
    %v1126 = vrcp.pop %v1120
    %v1127 = vmul.f32 1.0, %v1126
    %v1128 = vrcp.pop %v1121
    %v1129 = vmul.f32 1.0, %v1128
    %v1130 = vmul.f32 %v1018, %v1123
    %v1131 = vmul.f32 %v1020, %v1125
    %v1132 = vmul.f32 %v1100, %v1127
    %v1133 = vmul.f32 %v1102, %v1129
    %v1134 = vpack.c.bf16 %v1130, %v1130
    %v1135 = vpack.c.bf16 %v1131, %v1131
    %v1136 = vpack.c.bf16 %v1132, %v1132
    %v1137 = vpack.c.bf16 %v1133, %v1133
    %v1138 = vld [vmem:[#allocation9] sm:$0xf]
    %v1139 = vld [vmem:[#allocation9 + $0x4] sm:$0xf]
    %v1140 = vld [vmem:[#allocation9 + $0x8] sm:$0xf]
    %v1141 = vld [vmem:[#allocation9 + $0xc] sm:$0xf]
    %v1142 = vld [vmem:[#allocation9 + $0x10] sm:$0xf]
    %v1143 = vld [vmem:[#allocation9 + $0x14] sm:$0xf]
    %v1144 = vld [vmem:[#allocation9 + $0x18] sm:$0xf]
    %v1145 = vld [vmem:[#allocation9 + $0x1c] sm:$0xf]
    %v1146 = vld [vmem:[#allocation9 + $0x20] sm:$0xf]
    %v1147 = vld [vmem:[#allocation9 + $0x24] sm:$0xf]
    %v1148 = vld [vmem:[#allocation9 + $0x28] sm:$0xf]
    %v1149 = vld [vmem:[#allocation9 + $0x2c] sm:$0xf]
    %v1150 = vld [vmem:[#allocation9 + $0x30] sm:$0xf]
    %v1151 = vld [vmem:[#allocation9 + $0x34] sm:$0xf]
    %v1152 = vld [vmem:[#allocation9 + $0x38] sm:$0xf]
    %v1153 = vld [vmem:[#allocation9 + $0x3c] sm:$0xf]
    %v1154 = vld [vmem:[#allocation9 + $0x40] sm:$0xf]
    %v1155 = vld [vmem:[#allocation9 + $0x44] sm:$0xf]
    %v1156 = vld [vmem:[#allocation9 + $0x48] sm:$0xf]
    %v1157 = vld [vmem:[#allocation9 + $0x4c] sm:$0xf]
    %v1158 = vld [vmem:[#allocation9 + $0x50] sm:$0xf]
    %v1159 = vld [vmem:[#allocation9 + $0x54] sm:$0xf]
    %v1160 = vld [vmem:[#allocation9 + $0x58] sm:$0xf]
    %v1161 = vld [vmem:[#allocation9 + $0x5c] sm:$0xf]
    %v1162 = vld [vmem:[#allocation9 + $0x60] sm:$0xf]
    %v1163 = vld [vmem:[#allocation9 + $0x64] sm:$0xf]
    %v1164 = vld [vmem:[#allocation9 + $0x68] sm:$0xf]
    %v1165 = vld [vmem:[#allocation9 + $0x6c] sm:$0xf]
    %v1166 = vld [vmem:[#allocation9 + $0x70] sm:$0xf]
    %v1167 = vld [vmem:[#allocation9 + $0x74] sm:$0xf]
    %v1168 = vld [vmem:[#allocation9 + $0x78] sm:$0xf]
    %v1169 = vld [vmem:[#allocation9 + $0x7c] sm:$0xf]
    %v1170 = vld [vmem:[#allocation9 + $0x80] sm:$0xf]
    %v1171 = vld [vmem:[#allocation9 + $0x84] sm:$0xf]
    %v1172 = vld [vmem:[#allocation9 + $0x88] sm:$0xf]
    %v1173 = vld [vmem:[#allocation9 + $0x8c] sm:$0xf]
    %v1174 = vld [vmem:[#allocation9 + $0x90] sm:$0xf]
    %v1175 = vld [vmem:[#allocation9 + $0x94] sm:$0xf]
    %v1176 = vld [vmem:[#allocation9 + $0x98] sm:$0xf]
    %v1177 = vld [vmem:[#allocation9 + $0x9c] sm:$0xf]
    %v1178 = vld [vmem:[#allocation9 + $0xa0] sm:$0xf]
    %v1179 = vld [vmem:[#allocation9 + $0xa4] sm:$0xf]
    %v1180 = vld [vmem:[#allocation9 + $0xa8] sm:$0xf]
    %v1181 = vld [vmem:[#allocation9 + $0xac] sm:$0xf]
    %v1182 = vld [vmem:[#allocation9 + $0xb0] sm:$0xf]
    %v1183 = vld [vmem:[#allocation9 + $0xb4] sm:$0xf]
    %v1184 = vld [vmem:[#allocation9 + $0xb8] sm:$0xf]
    %v1185 = vld [vmem:[#allocation9 + $0xbc] sm:$0xf]
    %v1186 = vld [vmem:[#allocation9 + $0xc0] sm:$0xf]
    %v1187 = vld [vmem:[#allocation9 + $0xc4] sm:$0xf]
    %v1188 = vld [vmem:[#allocation9 + $0xc8] sm:$0xf]
    %v1189 = vld [vmem:[#allocation9 + $0xcc] sm:$0xf]
    %v1190 = vld [vmem:[#allocation9 + $0xd0] sm:$0xf]
    %v1191 = vld [vmem:[#allocation9 + $0xd4] sm:$0xf]
    %v1192 = vld [vmem:[#allocation9 + $0xd8] sm:$0xf]
    %v1193 = vld [vmem:[#allocation9 + $0xdc] sm:$0xf]
    %v1194 = vld [vmem:[#allocation9 + $0xe0] sm:$0xf]
    %v1195 = vld [vmem:[#allocation9 + $0xe4] sm:$0xf]
    %v1196 = vld [vmem:[#allocation9 + $0xe8] sm:$0xf]
    %v1197 = vld [vmem:[#allocation9 + $0xec] sm:$0xf]
    %v1198 = vld [vmem:[#allocation9 + $0xf0] sm:$0xf]
    %v1199 = vld [vmem:[#allocation9 + $0xf4] sm:$0xf]
    %v1200 = vld [vmem:[#allocation9 + $0xf8] sm:$0xf]
    %v1201 = vld [vmem:[#allocation9 + $0xfc] sm:$0xf]
    %v1202 = vld [vmem:[#allocation11] sm:$0x1]
    %v1204 = vlaneseq
    %v1205 = vshrl.u32 %v1204, 7
    %v1206 = vsub.s32 0, %v1205
    %v1207 = vrot.slane %v1202, %v1206
    %v1273 = vunpack.c.l.b16 %v1138
    %v1274 = vunpack.c.l.b16 %v1139
    %v1275 = vunpack.c.l.b16 %v1140
    %v1276 = vunpack.c.l.b16 %v1141
    %v1277 = vunpack.c.l.b16 %v1142
    %v1278 = vunpack.c.l.b16 %v1143
    %v1279 = vunpack.c.l.b16 %v1144
    %v1280 = vunpack.c.l.b16 %v1145
    %v1281 = vunpack.c.l.b16 %v1146
    %v1282 = vunpack.c.l.b16 %v1147
    %v1283 = vunpack.c.l.b16 %v1148
    %v1284 = vunpack.c.l.b16 %v1149
    %v1285 = vunpack.c.l.b16 %v1150
    %v1286 = vunpack.c.l.b16 %v1151
    %v1287 = vunpack.c.l.b16 %v1152
    %v1288 = vunpack.c.l.b16 %v1153
    %v1289 = vunpack.c.l.b16 %v1154
    %v1290 = vunpack.c.l.b16 %v1155
    %v1291 = vunpack.c.l.b16 %v1156
    %v1292 = vunpack.c.l.b16 %v1157
    %v1293 = vunpack.c.l.b16 %v1158
    %v1294 = vunpack.c.l.b16 %v1159
    %v1295 = vunpack.c.l.b16 %v1160
    %v1296 = vunpack.c.l.b16 %v1161
    %v1297 = vunpack.c.l.b16 %v1162
    %v1298 = vunpack.c.l.b16 %v1163
    %v1299 = vunpack.c.l.b16 %v1164
    %v1300 = vunpack.c.l.b16 %v1165
    %v1301 = vunpack.c.l.b16 %v1166
    %v1302 = vunpack.c.l.b16 %v1167
    %v1303 = vunpack.c.l.b16 %v1168
    %v1304 = vunpack.c.l.b16 %v1169
    %v1305 = vunpack.c.l.b16 %v1170
    %v1306 = vunpack.c.l.b16 %v1171
    %v1307 = vunpack.c.l.b16 %v1172
    %v1308 = vunpack.c.l.b16 %v1173
    %v1309 = vunpack.c.l.b16 %v1174
    %v1310 = vunpack.c.l.b16 %v1175
    %v1311 = vunpack.c.l.b16 %v1176
    %v1312 = vunpack.c.l.b16 %v1177
    %v1313 = vunpack.c.l.b16 %v1178
    %v1314 = vunpack.c.l.b16 %v1179
    %v1315 = vunpack.c.l.b16 %v1180
    %v1316 = vunpack.c.l.b16 %v1181
    %v1317 = vunpack.c.l.b16 %v1182
    %v1318 = vunpack.c.l.b16 %v1183
    %v1319 = vunpack.c.l.b16 %v1184
    %v1320 = vunpack.c.l.b16 %v1185
    %v1321 = vunpack.c.l.b16 %v1186
    %v1322 = vunpack.c.l.b16 %v1187
    %v1323 = vunpack.c.l.b16 %v1188
    %v1324 = vunpack.c.l.b16 %v1189
    %v1325 = vunpack.c.l.b16 %v1190
    %v1326 = vunpack.c.l.b16 %v1191
    %v1327 = vunpack.c.l.b16 %v1192
    %v1328 = vunpack.c.l.b16 %v1193
    %v1329 = vunpack.c.l.b16 %v1194
    %v1330 = vunpack.c.l.b16 %v1195
    %v1331 = vunpack.c.l.b16 %v1196
    %v1332 = vunpack.c.l.b16 %v1197
    %v1333 = vunpack.c.l.b16 %v1198
    %v1334 = vunpack.c.l.b16 %v1199
    %v1335 = vunpack.c.l.b16 %v1200
    %v1336 = vunpack.c.l.b16 %v1201
    %v1337 = vpack.c.b16 %v1274, %v1273
    %v1338 = vpack.c.b16 %v1276, %v1275
    %v1339 = vpack.c.b16 %v1278, %v1277
    %v1340 = vpack.c.b16 %v1280, %v1279
    %v1341 = vpack.c.b16 %v1282, %v1281
    %v1342 = vpack.c.b16 %v1284, %v1283
    %v1343 = vpack.c.b16 %v1286, %v1285
    %v1344 = vpack.c.b16 %v1288, %v1287
    %v1345 = vpack.c.b16 %v1290, %v1289
    %v1346 = vpack.c.b16 %v1292, %v1291
    %v1347 = vpack.c.b16 %v1294, %v1293
    %v1348 = vpack.c.b16 %v1296, %v1295
    %v1349 = vpack.c.b16 %v1298, %v1297
    %v1350 = vpack.c.b16 %v1300, %v1299
    %v1351 = vpack.c.b16 %v1302, %v1301
    %v1352 = vpack.c.b16 %v1304, %v1303
    %v1353 = vpack.c.b16 %v1306, %v1305
    %v1354 = vpack.c.b16 %v1308, %v1307
    %v1355 = vpack.c.b16 %v1310, %v1309
    %v1356 = vpack.c.b16 %v1312, %v1311
    %v1357 = vpack.c.b16 %v1314, %v1313
    %v1358 = vpack.c.b16 %v1316, %v1315
    %v1359 = vpack.c.b16 %v1318, %v1317
    %v1360 = vpack.c.b16 %v1320, %v1319
    %v1361 = vpack.c.b16 %v1322, %v1321
    %v1362 = vpack.c.b16 %v1324, %v1323
    %v1363 = vpack.c.b16 %v1326, %v1325
    %v1364 = vpack.c.b16 %v1328, %v1327
    %v1365 = vpack.c.b16 %v1330, %v1329
    %v1366 = vpack.c.b16 %v1332, %v1331
    %v1367 = vpack.c.b16 %v1334, %v1333
    %v1368 = vpack.c.b16 %v1336, %v1335
    %1401 = vmatprep.subr.bf16.mxu0 0
    %1402 = vmatpush1.bf16.msra.mxu0 %v1337
    %1403 = vmatprep.subr.bf16.mxu0 0
    %1404 = vmatpush1.bf16.msra.mxu0 %v1338
    %1405 = vmatprep.subr.bf16.mxu0 0
    %1406 = vmatpush1.bf16.msra.mxu0 %v1339
    %1407 = vmatprep.subr.bf16.mxu0 0
    %1408 = vmatpush1.bf16.msra.mxu0 %v1340
    %1409 = vmatprep.subr.bf16.mxu0 0
    %1410 = vmatpush1.bf16.msra.mxu0 %v1341
    %1411 = vmatprep.subr.bf16.mxu0 0
    %1412 = vmatpush1.bf16.msra.mxu0 %v1342
    %1413 = vmatprep.subr.bf16.mxu0 0
    %1414 = vmatpush1.bf16.msra.mxu0 %v1343
    %1415 = vmatprep.subr.bf16.mxu0 0
    %1416 = vmatpush1.bf16.msra.mxu0 %v1344
    %1417 = vmatprep.subr.bf16.mxu0 0
    %1418 = vmatpush1.bf16.msra.mxu0 %v1345
    %1419 = vmatprep.subr.bf16.mxu0 0
    %1420 = vmatpush1.bf16.msra.mxu0 %v1346
    %1421 = vmatprep.subr.bf16.mxu0 0
    %1422 = vmatpush1.bf16.msra.mxu0 %v1347
    %1423 = vmatprep.subr.bf16.mxu0 0
    %1424 = vmatpush1.bf16.msra.mxu0 %v1348
    %1425 = vmatprep.subr.bf16.mxu0 0
    %1426 = vmatpush1.bf16.msra.mxu0 %v1349
    %1427 = vmatprep.subr.bf16.mxu0 0
    %1428 = vmatpush1.bf16.msra.mxu0 %v1350
    %1429 = vmatprep.subr.bf16.mxu0 0
    %1430 = vmatpush1.bf16.msra.mxu0 %v1351
    %1431 = vmatprep.subr.bf16.mxu0 0
    %1432 = vmatpush1.bf16.msra.mxu0 %v1352
    %1433 = vmatprep.mubr.bf16.mxu0 %v1135
    %1434 = vmatmul.mubr.bf16.gmra.mrb[0].mxu0 %v1134
    %v1435 = vpop.f32.mrb[0].mxu0
    %v1436 = vadd.f32 %v1207, %v1435
    %v1437 = vpop.f32.mrb[0].mxu0
    %v1438 = vpop.f32.mrb[0].mxu0
    %v1439 = vpop.f32.mrb[0].mxu0
    %1440 = vdwg.mxu0
    %1441 = vmatprep.subr.bf16.mxu0 0
    %1442 = vmatpush1.bf16.msra.mxu0 %v1353
    %1443 = vmatprep.subr.bf16.mxu0 0
    %1444 = vmatpush1.bf16.msra.mxu0 %v1354
    %1445 = vmatprep.subr.bf16.mxu0 0
    %1446 = vmatpush1.bf16.msra.mxu0 %v1355
    %1447 = vmatprep.subr.bf16.mxu0 0
    %1448 = vmatpush1.bf16.msra.mxu0 %v1356
    %1449 = vmatprep.subr.bf16.mxu0 0
    %1450 = vmatpush1.bf16.msra.mxu0 %v1357
    %1451 = vmatprep.subr.bf16.mxu0 0
    %1452 = vmatpush1.bf16.msra.mxu0 %v1358
    %1453 = vmatprep.subr.bf16.mxu0 0
    %1454 = vmatpush1.bf16.msra.mxu0 %v1359
    %1455 = vmatprep.subr.bf16.mxu0 0
    %1456 = vmatpush1.bf16.msra.mxu0 %v1360
    %1457 = vmatprep.subr.bf16.mxu0 0
    %1458 = vmatpush1.bf16.msra.mxu0 %v1361
    %1459 = vmatprep.subr.bf16.mxu0 0
    %1460 = vmatpush1.bf16.msra.mxu0 %v1362
    %1461 = vmatprep.subr.bf16.mxu0 0
    %1462 = vmatpush1.bf16.msra.mxu0 %v1363
    %1463 = vmatprep.subr.bf16.mxu0 0
    %1464 = vmatpush1.bf16.msra.mxu0 %v1364
    %1465 = vmatprep.subr.bf16.mxu0 0
    %1466 = vmatpush1.bf16.msra.mxu0 %v1365
    %1467 = vmatprep.subr.bf16.mxu0 0
    %1468 = vmatpush1.bf16.msra.mxu0 %v1366
    %1469 = vmatprep.subr.bf16.mxu0 0
    %1470 = vmatpush1.bf16.msra.mxu0 %v1367
    %1471 = vmatprep.subr.bf16.mxu0 0
    %1472 = vmatpush1.bf16.msra.mxu0 %v1368
    %1473 = vmatprep.mubr.bf16.mxu0 %v1137
    %1474 = vmatmul.mubr.bf16.gmra.mrb[0].mxu0 %v1136
    %v1475 = vpop.f32.mrb[0].mxu0
    %v1476 = vadd.f32 %v1436, %v1475
    %v1477 = vpop.f32.mrb[0].mxu0
    %v1478 = vpop.f32.mrb[0].mxu0
    %v1479 = vpop.f32.mrb[0].mxu0
    %1480 = vdwg.mxu0
    %v1481 = vxor.u32 %v1476, 2147483648
    %v1482 = vmul.f32 %v1481, 1.442695
    %v1483 = vpow.pop %v1482
    %v1484 = vadd.f32 %v1483, 1.0
    %v1485 = vrcp.pop %v1484
    %v1486 = vmul.f32 1.0, %v1485
    %v1487 = vmul.f32 %v1476, %v1486
    %v1488 = vld [vmem:[#allocation12] sm:$0x1]
    %v1490 = vlaneseq
    %v1491 = vshrl.u32 %v1490, 7
    %v1492 = vsub.s32 0, %v1491
    %v1493 = vrot.slane %v1488, %v1492
    %v1495 = vmul.f32 %v1487, %v1493
    %1496 = vadd.xlane.f32.xlu0 %v1495
    %v1497 = vpop.xlane.xlu0 %1496
    %v1498 = vld [vmem:[%s137] sm:$0x1]
    %v1500 = vlaneseq
    %v1501 = vshrl.u32 %v1500, 7
    %v1502 = vsub.s32 0, %v1501
    %v1503 = vrot.slane %v1498, %v1502
    %v1505 = vadd.f32 %v1497, %v1503
    %v1506 = vxor.u32 %v1505, 2147483648
    %v1507 = vmul.f32 %v1506, 1.442695
    %v1508 = vpow.pop %v1507
    %v1509 = vadd.f32 %v1508, 1.0
    %v1510 = vrcp.pop %v1509
    %v1511 = vmul.f32 1.0, %v1510
    %vm1512 = vcmask 7168
    %1513 = vst.msk [vmem:[%s8] sm:$0xff] %vm1512, %v1511
    // Predicated region
    $region54: #{_ebm_forward.1} parent=1 // pred_check
      _
    $region55: #{_ebm_forward.1} parent=1 // pred_check_branch
      %1515 = sbr.rel (0) target = $region57
    $region56: #{_ebm_forward.1} parent=1 // pred_region
      _
    $region57: #{_ebm_forward.1} parent=1 // pred_fallthru
      _
    // Predicated region
    $region58: #{_ebm_forward.1} parent=1 // pred_check
      _
    $region59: #{_ebm_forward.1} parent=1 // pred_check_branch
      %1517 = sbr.rel (0) target = $region61
    $region60: #{_ebm_forward.1} parent=1 // pred_region
      _
    $region61: #{_ebm_forward.1} parent=1 // pred_fallthru
      _
    %1518 = vsyncpa [#allocation5], 1
    %1519 = vsyncpa [#allocation7], 1
    %1520 = vsyncpa [#allocation10], 1
    %1521 = vsyncpa [#allocation13], 1

</llo_original>
